<compile_context>
chip_gen: v7x
topology: tpu7x:2x2x1
jax: 0.10.0
libtpu: 0.0.40
codegen_flags: <defaults>
</compile_context>

<pallas_src>
import functools

import jax
import jax.numpy as jnp
from jax.experimental import pallas as pl
from jax.experimental.pallas import tpu as pltpu

LANE = 128  # TPU lane width; feature dims are padded to multiples of this.


def _round_up(n, m):
    return ((n + m - 1) // m) * m


def _mish(y):
    # mish(x) = x * tanh(softplus(x)) = x * ((1+e^x)^2 - 1) / ((1+e^x)^2 + 1)
    # -> one EUP exp + one approx reciprocal instead of exp + log1p + tanh.
    e = jnp.exp(jnp.minimum(y, 20.0))
    t = (1.0 + e) * (1.0 + e)
    r = (t - 1.0) * pl.reciprocal(t + 1.0, approx=True)
    return jnp.where(y > 20.0, y, y * r)


def _mlp_kernel(*refs, layer_sizes, padded_sizes, monotonic, layernorm,
                last_activation, eps):
    """refs = (x_ref, w0, b0, w1, b1, ..., o_ref). Weights are padded,
    PyTorch [out, in] layout; biases are [1, out_padded]."""
    n_layers = len(layer_sizes) - 1
    x_ref = refs[0]
    o_ref = refs[1 + 2 * n_layers]

    h = x_ref[...].astype(jnp.float32)                    # [TM, K0]

    for i in range(n_layers):
        w = refs[1 + 2 * i][...]                          # [Np_out, Kp_in]
        b = refs[2 + 2 * i][...].astype(jnp.float32)      # [1, Np_out]

        if monotonic:
            # LinearAbs: abs on the weight only (not the bias). For frozen
            # inference weights this could be hoisted into pack_params().
            w = jnp.abs(w)

        # y = h @ W^T + b  (contract dim 1 of both; f32 accumulation on MXU).
        y = jax.lax.dot_general(
            h.astype(w.dtype), w,
            dimension_numbers=(((1,), (1,)), ((), ())),
            preferred_element_type=jnp.float32) + b       # [TM, Np_out]

        is_last = (i == n_layers - 1)

        if layernorm and not is_last:
            n_act = layer_sizes[i + 1]
            n_pad = padded_sizes[i + 1]
            if n_act == n_pad:
                ym = y
            else:
                lane = jax.lax.broadcasted_iota(jnp.int32, (1, n_pad), 1)
                ym = jnp.where(lane < n_act, y, 0.0)
            # Single fused pass: E[y], E[y^2] over the real (unpadded) lanes.
            s1 = jnp.sum(ym, axis=-1, keepdims=True)
            s2 = jnp.sum(ym * ym, axis=-1, keepdims=True)
            inv_n = 1.0 / float(n_act)
            mean = s1 * inv_n
            var = jnp.maximum(s2 * inv_n - mean * mean, 0.0)
            y = (y - mean) * jax.lax.rsqrt(var + eps)
            # Padded lanes become nonzero here, but the next layer's padded
            # input columns of W are zero, so they never contaminate results.

        if (not is_last) or last_activation:
            y = _mish(y)

        h = y

    o_ref[...] = h.astype(o_ref.dtype)


def init_mlp_params(key, layer_sizes, dtype=jnp.float32):
    """PyTorch-style nn.Linear init: U(-1/sqrt(fan_in), 1/sqrt(fan_in)).
    Weights are [out, in] (PyTorch layout). Use dtype=jnp.bfloat16 on v6e/v7x
    to halve weight DMA bytes (accumulation stays f32 inside the kernel)."""
    params = []
    for i in range(len(layer_sizes) - 1):
        fan_in, fan_out = layer_sizes[i], layer_sizes[i + 1]
        key, kw, kb = jax.random.split(key, 3)
        bound = 1.0 / jnp.sqrt(float(fan_in))
        w = jax.random.uniform(kw, (fan_out, fan_in), dtype, -bound, bound)
        b = jax.random.uniform(kb, (fan_out,), dtype, -bound, bound)
        params.append((w, b))
    return params


def pack_params(params, layer_sizes):
    """One-time packing: zero-pad every hidden/output feature dim to a multiple
    of 128 (lane-dense). Layer 0's input dim stays natural (full-array block).
    Keeps PyTorch [out, in] layout — no transposes anywhere."""
    layer_sizes = [int(s) for s in layer_sizes]
    padded = [layer_sizes[0]] + [_round_up(s, LANE) for s in layer_sizes[1:]]
    packed = []
    for i, (w, b) in enumerate(params):
        out_p = padded[i + 1]
        in_p = layer_sizes[0] if i == 0 else padded[i]
        wp = jnp.zeros((out_p, in_p), w.dtype).at[:w.shape[0], :w.shape[1]].set(w)
        bp = jnp.zeros((1, out_p), b.dtype).at[0, :b.shape[0]].set(b)
        packed.append((wp, bp))
    return packed


def mlp_forward(x, packed_params, layer_sizes, *, monotonic=False,
                layernorm=False, last_activation=False, eps=1e-5, tile_m=256):
    """Mirrors MLP.forward: Linear (+LayerNorm +Mish) for hidden layers,
    plain Linear (optionally +Mish) for the final layer. x: [M, layer_sizes[0]]."""
    layer_sizes = tuple(int(s) for s in layer_sizes)
    n_layers = len(layer_sizes) - 1
    assert len(packed_params) == n_layers
    M, K0 = x.shape
    assert K0 == layer_sizes[0]

    padded = (K0,) + tuple(_round_up(s, LANE) for s in layer_sizes[1:])
    n_out, n_out_p = layer_sizes[-1], padded[-1]

    # Batch tiling: one full block for small batches; otherwise pad M up to a
    # multiple of tile_m and shard the (8,128)-aligned tiles across cores.
    if M <= tile_m:
        tm, mp = M, M
    else:
        tm = tile_m
        mp = _round_up(M, tm)
        if mp != M:
            x = jnp.pad(x, ((0, mp - M), (0, 0)))
    grid_m = mp // tm

    kernel = functools.partial(
        _mlp_kernel, layer_sizes=layer_sizes, padded_sizes=padded,
        monotonic=monotonic, layernorm=layernorm,
        last_activation=last_activation, eps=eps)

    in_specs = [pl.BlockSpec((tm, K0), lambda i: (i, 0))]
    flat_args = [x]
    for wp, bp in packed_params:
        in_specs.append(pl.BlockSpec(wp.shape, lambda i: (0, 0)))  # VMEM-resident
        in_specs.append(pl.BlockSpec(bp.shape, lambda i: (0, 0)))
        flat_args.append(wp)
        flat_args.append(bp)

    out = pl.pallas_call(
        kernel,
        out_shape=jax.ShapeDtypeStruct((mp, n_out_p), x.dtype),
        grid=(grid_m,),
        in_specs=in_specs,
        out_specs=pl.BlockSpec((tm, n_out_p), lambda i: (i, 0)),
        compiler_params=pltpu.CompilerParams(
            dimension_semantics=("parallel",),       # shards batch tiles on v7x's 2 TCs
            vmem_limit_bytes=32 * 1024 * 1024),      # explicit; < v7x 64 MiB physical
    )(*flat_args)

    return out[:M, :n_out]
    # TODO(synk): batchnorm=True path (nn.BatchNorm training-mode batch stats)
    # not implemented — the reference code's `nn.BatchNorm` is itself invalid.


if __name__ == "__main__":
    key = jax.random.PRNGKey(0)
    layer_sizes = [16, 32, 32, 8]
    batch = 8

    kx, kp = jax.random.split(key)
    x = jax.random.normal(kx, (batch, layer_sizes[0]), jnp.float32)
    params = init_mlp_params(kp, layer_sizes)
    packed = pack_params(params, layer_sizes)

    # Default MLP: Mish hidden activations, plain final Linear.
    out = mlp_forward(x, packed, layer_sizes)
    out = jax.block_until_ready(out)
    assert out.shape == (batch, layer_sizes[-1])

    # Exercise the monotonic (LinearAbs) + LayerNorm path as well.
    out2 = mlp_forward(x, packed, layer_sizes, monotonic=True, layernorm=True,
                       last_activation=True)
    out2 = jax.block_until_ready(out2)
    assert out2.shape == (batch, layer_sizes[-1])

    print("KERNEL_OK")
</pallas_src>

<mosaic_0001>
module attributes {stable_mosaic.version = 11 : i64} {
  func.func @_mlp_kernel(%arg0: i32, %arg1: memref<8x16xf32, #tpu.memory_space<vmem>>, %arg2: memref<128x16xf32, #tpu.memory_space<vmem>>, %arg3: memref<1x128xf32, #tpu.memory_space<vmem>>, %arg4: memref<128x128xf32, #tpu.memory_space<vmem>>, %arg5: memref<1x128xf32, #tpu.memory_space<vmem>>, %arg6: memref<128x128xf32, #tpu.memory_space<vmem>>, %arg7: memref<1x128xf32, #tpu.memory_space<vmem>>, %arg8: memref<8x128xf32, #tpu.memory_space<vmem>>) attributes {dimension_semantics = [#tpu.dimension_semantics<parallel>], iteration_bounds = array<i64: 1>, scalar_prefetch = 0 : i64, scratch_operands = 0 : i64, tpu.core_type = #tpu.core_type<tc>, window_params = [{transform_indices = @transform_0, window_bounds = array<i64: 8, 16>}, {pipeline_mode = #tpu.pipeline_mode<synchronous>, transform_indices = @transform_1, window_bounds = array<i64: 128, 16>}, {pipeline_mode = #tpu.pipeline_mode<synchronous>, transform_indices = @transform_2, window_bounds = array<i64: 1, 128>}, {pipeline_mode = #tpu.pipeline_mode<synchronous>, transform_indices = @transform_3, window_bounds = array<i64: 128, 128>}, {pipeline_mode = #tpu.pipeline_mode<synchronous>, transform_indices = @transform_4, window_bounds = array<i64: 1, 128>}, {pipeline_mode = #tpu.pipeline_mode<synchronous>, transform_indices = @transform_5, window_bounds = array<i64: 128, 128>}, {pipeline_mode = #tpu.pipeline_mode<synchronous>, transform_indices = @transform_6, window_bounds = array<i64: 1, 128>}, {transform_indices = @transform_7, window_bounds = array<i64: 8, 128>}]} {
    %c0 = arith.constant 0 : index
    %c0_0 = arith.constant 0 : index
    %0 = vector.load %arg1[%c0, %c0_0] : memref<8x16xf32, #tpu.memory_space<vmem>>, vector<8x16xf32>
    %c0_1 = arith.constant 0 : index
    %c0_2 = arith.constant 0 : index
    %1 = vector.load %arg2[%c0_1, %c0_2] : memref<128x16xf32, #tpu.memory_space<vmem>>, vector<128x16xf32>
    %c0_3 = arith.constant 0 : index
    %c0_4 = arith.constant 0 : index
    %2 = vector.load %arg3[%c0_3, %c0_4] : memref<1x128xf32, #tpu.memory_space<vmem>>, vector<1x128xf32>
    %cst = arith.constant dense<0.000000e+00> : vector<8x128xf32>
    %3 = tpu.matmul %0, %1, %cst {dimension_numbers = #tpu.dot_dimension_numbers<[1], [1], [0], [0], [0, 0, 1, 0], [], []>} : vector<8x16xf32>, vector<128x16xf32>, vector<8x128xf32> -> vector<8x128xf32>
    %4 = vector.broadcast %2 : vector<1x128xf32> to vector<8x128xf32>
    %5 = arith.addf %3, %4 : vector<8x128xf32>
    %cst_5 = arith.constant 2.000000e+01 : f32
    %6 = vector.broadcast %cst_5 : f32 to vector<8x128xf32>
    %7 = arith.minimumf %5, %6 : vector<8x128xf32>
    %8 = math.exp %7 : vector<8x128xf32>
    %cst_6 = arith.constant 1.000000e+00 : f32
    %9 = vector.broadcast %cst_6 : f32 to vector<8x128xf32>
    %10 = arith.addf %9, %8 : vector<8x128xf32>
    %cst_7 = arith.constant 1.000000e+00 : f32
    %11 = vector.broadcast %cst_7 : f32 to vector<8x128xf32>
    %12 = arith.addf %11, %8 : vector<8x128xf32>
    %13 = arith.mulf %10, %12 : vector<8x128xf32>
    %cst_8 = arith.constant 1.000000e+00 : f32
    %14 = vector.broadcast %cst_8 : f32 to vector<8x128xf32>
    %15 = arith.subf %13, %14 : vector<8x128xf32>
    %cst_9 = arith.constant 1.000000e+00 : f32
    %16 = vector.broadcast %cst_9 : f32 to vector<8x128xf32>
    %17 = arith.addf %13, %16 : vector<8x128xf32>
    %18 = tpu.reciprocal %17 {approx = true} : vector<8x128xf32> -> vector<8x128xf32>
    %19 = arith.mulf %15, %18 : vector<8x128xf32>
    %cst_10 = arith.constant 2.000000e+01 : f32
    %20 = vector.broadcast %cst_10 : f32 to vector<8x128xf32>
    %21 = arith.cmpf ogt, %5, %20 : vector<8x128xf32>
    %22 = arith.mulf %5, %19 : vector<8x128xf32>
    %23 = arith.select %21, %5, %22 : vector<8x128xi1>, vector<8x128xf32>
    %c0_11 = arith.constant 0 : index
    %c0_12 = arith.constant 0 : index
    %24 = vector.load %arg4[%c0_11, %c0_12] : memref<128x128xf32, #tpu.memory_space<vmem>>, vector<128x128xf32>
    %c0_13 = arith.constant 0 : index
    %c0_14 = arith.constant 0 : index
    %25 = vector.load %arg5[%c0_13, %c0_14] : memref<1x128xf32, #tpu.memory_space<vmem>>, vector<1x128xf32>
    %cst_15 = arith.constant dense<0.000000e+00> : vector<8x128xf32>
    %26 = tpu.matmul %23, %24, %cst_15 {dimension_numbers = #tpu.dot_dimension_numbers<[1], [1], [0], [0], [0, 0, 1, 0], [], []>} : vector<8x128xf32>, vector<128x128xf32>, vector<8x128xf32> -> vector<8x128xf32>
    %27 = vector.broadcast %25 : vector<1x128xf32> to vector<8x128xf32>
    %28 = arith.addf %26, %27 : vector<8x128xf32>
    %cst_16 = arith.constant 2.000000e+01 : f32
    %29 = vector.broadcast %cst_16 : f32 to vector<8x128xf32>
    %30 = arith.minimumf %28, %29 : vector<8x128xf32>
    %31 = math.exp %30 : vector<8x128xf32>
    %cst_17 = arith.constant 1.000000e+00 : f32
    %32 = vector.broadcast %cst_17 : f32 to vector<8x128xf32>
    %33 = arith.addf %32, %31 : vector<8x128xf32>
    %cst_18 = arith.constant 1.000000e+00 : f32
    %34 = vector.broadcast %cst_18 : f32 to vector<8x128xf32>
    %35 = arith.addf %34, %31 : vector<8x128xf32>
    %36 = arith.mulf %33, %35 : vector<8x128xf32>
    %cst_19 = arith.constant 1.000000e+00 : f32
    %37 = vector.broadcast %cst_19 : f32 to vector<8x128xf32>
    %38 = arith.subf %36, %37 : vector<8x128xf32>
    %cst_20 = arith.constant 1.000000e+00 : f32
    %39 = vector.broadcast %cst_20 : f32 to vector<8x128xf32>
    %40 = arith.addf %36, %39 : vector<8x128xf32>
    %41 = tpu.reciprocal %40 {approx = true} : vector<8x128xf32> -> vector<8x128xf32>
    %42 = arith.mulf %38, %41 : vector<8x128xf32>
    %cst_21 = arith.constant 2.000000e+01 : f32
    %43 = vector.broadcast %cst_21 : f32 to vector<8x128xf32>
    %44 = arith.cmpf ogt, %28, %43 : vector<8x128xf32>
    %45 = arith.mulf %28, %42 : vector<8x128xf32>
    %46 = arith.select %44, %28, %45 : vector<8x128xi1>, vector<8x128xf32>
    %c0_22 = arith.constant 0 : index
    %c0_23 = arith.constant 0 : index
    %47 = vector.load %arg6[%c0_22, %c0_23] : memref<128x128xf32, #tpu.memory_space<vmem>>, vector<128x128xf32>
    %c0_24 = arith.constant 0 : index
    %c0_25 = arith.constant 0 : index
    %48 = vector.load %arg7[%c0_24, %c0_25] : memref<1x128xf32, #tpu.memory_space<vmem>>, vector<1x128xf32>
    %cst_26 = arith.constant dense<0.000000e+00> : vector<8x128xf32>
    %49 = tpu.matmul %46, %47, %cst_26 {dimension_numbers = #tpu.dot_dimension_numbers<[1], [1], [0], [0], [0, 0, 1, 0], [], []>} : vector<8x128xf32>, vector<128x128xf32>, vector<8x128xf32> -> vector<8x128xf32>
    %50 = vector.broadcast %48 : vector<1x128xf32> to vector<8x128xf32>
    %51 = arith.addf %49, %50 : vector<8x128xf32>
    %c0_27 = arith.constant 0 : index
    %c0_28 = arith.constant 0 : index
    %52 = vector.load %arg8[%c0_27, %c0_28] : memref<8x128xf32, #tpu.memory_space<vmem>>, vector<8x128xf32>
    tpu.vector_store %arg8[%c0_27, %c0_28], %51 {strides = array<i32>} : memref<8x128xf32, #tpu.memory_space<vmem>>, vector<8x128xf32>,
    return
  }
  func.func @transform_0(%arg0: i32) -> (i32, i32) {
    %c0_i32 = arith.constant 0 : i32
    %c0_i32_0 = arith.constant 0 : i32
    return %arg0, %c0_i32 : i32, i32
  }
  func.func @transform_1(%arg0: i32) -> (i32, i32) {
    %c0_i32 = arith.constant 0 : i32
    %c0_i32_0 = arith.constant 0 : i32
    %c0_i32_1 = arith.constant 0 : i32
    return %c0_i32, %c0_i32_0 : i32, i32
  }
  func.func @transform_2(%arg0: i32) -> (i32, i32) {
    %c0_i32 = arith.constant 0 : i32
    %c0_i32_0 = arith.constant 0 : i32
    %c0_i32_1 = arith.constant 0 : i32
    return %c0_i32, %c0_i32_0 : i32, i32
  }
  func.func @transform_3(%arg0: i32) -> (i32, i32) {
    %c0_i32 = arith.constant 0 : i32
    %c0_i32_0 = arith.constant 0 : i32
    %c0_i32_1 = arith.constant 0 : i32
    return %c0_i32, %c0_i32_0 : i32, i32
  }
  func.func @transform_4(%arg0: i32) -> (i32, i32) {
    %c0_i32 = arith.constant 0 : i32
    %c0_i32_0 = arith.constant 0 : i32
    %c0_i32_1 = arith.constant 0 : i32
    return %c0_i32, %c0_i32_0 : i32, i32
  }
  func.func @transform_5(%arg0: i32) -> (i32, i32) {
    %c0_i32 = arith.constant 0 : i32
    %c0_i32_0 = arith.constant 0 : i32
    %c0_i32_1 = arith.constant 0 : i32
    return %c0_i32, %c0_i32_0 : i32, i32
  }
  func.func @transform_6(%arg0: i32) -> (i32, i32) {
    %c0_i32 = arith.constant 0 : i32
    %c0_i32_0 = arith.constant 0 : i32
    %c0_i32_1 = arith.constant 0 : i32
    return %c0_i32, %c0_i32_0 : i32, i32
  }
  func.func @transform_7(%arg0: i32) -> (i32, i32) {
    %c0_i32 = arith.constant 0 : i32
    %c0_i32_0 = arith.constant 0 : i32
    return %arg0, %c0_i32 : i32, i32
  }
}

</mosaic_0001>

<llo_original>
// kernel: tpu_custom_call.1
$region0: #{tpu_custom_call.1}
  #allocation0 [shape = 'u32[]', space=smem, size = 0x4, offset = 0x4, fixed_abs, tag = 'smem constant byte address 0x4 - core index']
  #allocation1 [shape = 'u32[144,128]{1,0:T(1,128)}', space=vmem, size = 0x12000, scoped, tag = 'internal scratch']
  %s0 = inlined_call_operand.vmem [shape: f32[8,16], index: 0, kind: input, shape index: {}]
  %s1 = inlined_call_operand.vmem [shape: f32[128,16], index: 1, kind: input, shape index: {}]
  %s2 = inlined_call_operand.vmem [shape: f32[1,128], index: 2, kind: input, shape index: {}]
  %s3 = inlined_call_operand.vmem [shape: f32[128,128], index: 3, kind: input, shape index: {}]
  %s4 = inlined_call_operand.vmem [shape: f32[1,128], index: 4, kind: input, shape index: {}]
  %s5 = inlined_call_operand.hbm [shape: f32[128,128], index: 5, kind: input, shape index: {}]
  %s6 = inlined_call_operand.vmem [shape: f32[1,128], index: 6, kind: input, shape index: {}]
  %s7 = inlined_call_operand.hbm [shape: f32[8,128], index: 7, kind: output, shape index: {}]
  %s8 = sld [smem:[#allocation0]]
  $region42: #{tpu_custom_call.1} parent=0
    _
  %s10 = ssub.s32 1, %s8
  %s11 = scalar_select 0, %s10, %s8
  $region1: #{tpu_custom_call.1} parent=0
    #allocation2 [shape = 'u8[65536]{0}', space=vmem, size = 0x10000, scoped, tag = 'input window, operand 5, single buffered']
    #allocation3 [shape = 's32[1]{0}', space=sflag, size = 0x4, scoped, tag = 'scoped memory for tpu_custom_call.1']
    #allocation4 [shape = 's32[1]{0}', space=sflag, size = 0x4, scoped, tag = 'scoped memory for tpu_custom_call.1']
    #allocation5 [shape = 'u8[4096]{0}', space=vmem, size = 0x1000, scoped, tag = 'output window, operand 0, single buffered']
    %12 = vsyncpa [#allocation3], 0
    %13 = vsyncpa [#allocation4], 0
    // Predicated region
    $region2: #{tpu_custom_call.1} parent=1 // pred_check
      _
    $region3: #{tpu_custom_call.1} parent=1 // pred_check_branch
      %15 = sbr.rel (0) target = $region5
    $region4: #{tpu_custom_call.1} parent=1 // pred_region
      _
    $region5: #{tpu_custom_call.1} parent=1 // pred_fallthru
      _
    // Predicated region
    $region6: #{tpu_custom_call.1} parent=1 // pred_check
      _
    $region7: #{tpu_custom_call.1} parent=1 // pred_check_branch
      %17 = sbr.rel (0) target = $region9
    $region8: #{tpu_custom_call.1} parent=1 // pred_region
      _
    $region9: #{tpu_custom_call.1} parent=1 // pred_fallthru
      _
    // Predicated region
    $region10: #{tpu_custom_call.1} parent=1 // pred_check
      _
    $region11: #{tpu_custom_call.1} parent=1 // pred_check_branch
      %19 = sbr.rel (0) target = $region13
    $region12: #{tpu_custom_call.1} parent=1 // pred_region
      _
    $region13: #{tpu_custom_call.1} parent=1 // pred_fallthru
      _
    // Predicated region
    $region14: #{tpu_custom_call.1} parent=1 // pred_check
      _
    $region15: #{tpu_custom_call.1} parent=1 // pred_check_branch
      %21 = sbr.rel (0) target = $region17
    $region16: #{tpu_custom_call.1} parent=1 // pred_region
      _
    $region17: #{tpu_custom_call.1} parent=1 // pred_fallthru
      _
    // Predicated region
    $region18: #{tpu_custom_call.1} parent=1 // pred_check
      _
    $region19: #{tpu_custom_call.1} parent=1 // pred_check_branch
      %23 = sbr.rel (0) target = $region21
    $region20: #{tpu_custom_call.1} parent=1 // pred_region
      _
    $region21: #{tpu_custom_call.1} parent=1 // pred_fallthru
      _
    // Predicated region
    $region22: #{tpu_custom_call.1} parent=1 // pred_check
      _
    $region23: #{tpu_custom_call.1} parent=1 // pred_check_branch
      %25 = sbr.rel (0) target = $region25
    $region24: #{tpu_custom_call.1} parent=1 // pred_region
      %s27 = ssub.s32 2048, 2048
      %28 = vsyncadd [#allocation3], %s27
      %s29 = sshll.u32 [#allocation2], 4
      %s30 = int_to_ptr.vmem [resolvable:$true] %s29
      %35 = dma.hbm_to_vmem [thread:$0]  %s5, 2048, %s30, [#allocation3], 128, 128, 8
    $region25: #{tpu_custom_call.1} parent=1 // pred_fallthru
      _
    // Predicated region
    $region26: #{tpu_custom_call.1} parent=1 // pred_check
      _
    $region27: #{tpu_custom_call.1} parent=1 // pred_check_branch
      %37 = sbr.rel (0) target = $region29
    $region28: #{tpu_custom_call.1} parent=1 // pred_region
      _
    $region29: #{tpu_custom_call.1} parent=1 // pred_fallthru
      _
    // Predicated region
    $region30: #{tpu_custom_call.1} parent=1 // pred_check
      _
    $region31: #{tpu_custom_call.1} parent=1 // pred_check_branch
      %39 = sbr.rel (0) target = $region33
    $region32: #{tpu_custom_call.1} parent=1 // pred_region
      %40 = dma.done [#allocation3], 2048
    $region33: #{tpu_custom_call.1} parent=1 // pred_fallthru
      _
    %v41 = vld [vmem:[%s0] sm:$0xff]
    %v42 = vld [vmem:[%s1] sm:$0xff]
    %v43 = vld [vmem:[%s1 + $0x8] sm:$0xff]
    %v44 = vld [vmem:[%s1 + $0x10] sm:$0xff]
    %v45 = vld [vmem:[%s1 + $0x18] sm:$0xff]
    %v46 = vld [vmem:[%s1 + $0x20] sm:$0xff]
    %v47 = vld [vmem:[%s1 + $0x28] sm:$0xff]
    %v48 = vld [vmem:[%s1 + $0x30] sm:$0xff]
    %v49 = vld [vmem:[%s1 + $0x38] sm:$0xff]
    %v50 = vld [vmem:[%s1 + $0x40] sm:$0xff]
    %v51 = vld [vmem:[%s1 + $0x48] sm:$0xff]
    %v52 = vld [vmem:[%s1 + $0x50] sm:$0xff]
    %v53 = vld [vmem:[%s1 + $0x58] sm:$0xff]
    %v54 = vld [vmem:[%s1 + $0x60] sm:$0xff]
    %v55 = vld [vmem:[%s1 + $0x68] sm:$0xff]
    %v56 = vld [vmem:[%s1 + $0x70] sm:$0xff]
    %v57 = vld [vmem:[%s1 + $0x78] sm:$0xff]
    %v58 = vld [vmem:[%s2] sm:$0x1]
    %v60 = vlaneseq
    %v61 = vshrl.u32 %v60, 7
    %v62 = vsub.s32 0, %v61
    %v63 = vrot.slane %v58, %v62
    %vm65 = vcmask 130048
    %v67 = vsel %vm65, %v41, 0
    %v70 = vsel %vm65, %v42, 0
    %v73 = vsel %vm65, %v43, 0
    %v76 = vsel %vm65, %v44, 0
    %v79 = vsel %vm65, %v45, 0
    %v82 = vsel %vm65, %v46, 0
    %v85 = vsel %vm65, %v47, 0
    %v88 = vsel %vm65, %v48, 0
    %v91 = vsel %vm65, %v49, 0
    %v94 = vsel %vm65, %v50, 0
    %v97 = vsel %vm65, %v51, 0
    %v100 = vsel %vm65, %v52, 0
    %v103 = vsel %vm65, %v53, 0
    %v106 = vsel %vm65, %v54, 0
    %v109 = vsel %vm65, %v55, 0
    %v112 = vsel %vm65, %v56, 0
    %v115 = vsel %vm65, %v57, 0
    %117 = vmatprep.subr.mxu0 0.0
    %118 = vmatpush1.xpose.msra.mxu0 %v70
    %119 = vmatprep.subr.mxu0 0.0
    %120 = vmatpush1.xpose.msra.mxu0 %v73
    %121 = vmatprep.subr.mxu0 0.0
    %122 = vmatpush1.xpose.msra.mxu0 %v76
    %123 = vmatprep.subr.mxu0 0.0
    %124 = vmatpush1.xpose.msra.mxu0 %v79
    %125 = vmatprep.subr.mxu0 0.0
    %126 = vmatpush1.xpose.msra.mxu0 %v82
    %127 = vmatprep.subr.mxu0 0.0
    %128 = vmatpush1.xpose.msra.mxu0 %v85
    %129 = vmatprep.subr.mxu0 0.0
    %130 = vmatpush1.xpose.msra.mxu0 %v88
    %131 = vmatprep.subr.mxu0 0.0
    %132 = vmatpush1.xpose.msra.mxu0 %v91
    %133 = vmatprep.subr.mxu0 0.0
    %134 = vmatpush1.xpose.msra.mxu0 %v94
    %135 = vmatprep.subr.mxu0 0.0
    %136 = vmatpush1.xpose.msra.mxu0 %v97
    %137 = vmatprep.subr.mxu0 0.0
    %138 = vmatpush1.xpose.msra.mxu0 %v100
    %139 = vmatprep.subr.mxu0 0.0
    %140 = vmatpush1.xpose.msra.mxu0 %v103
    %141 = vmatprep.subr.mxu0 0.0
    %142 = vmatpush1.xpose.msra.mxu0 %v106
    %143 = vmatprep.subr.mxu0 0.0
    %144 = vmatpush1.xpose.msra.mxu0 %v109
    %145 = vmatprep.subr.mxu0 0.0
    %146 = vmatpush1.xpose.msra.mxu0 %v112
    %147 = vmatprep.subr.mxu0 0.0
    %148 = vmatpush1.xpose.msra.mxu0 %v115
    %149 = vmatprep.subr.mxu0 0.0
    %150 = vmatpush1.xpose.msra.mxu0 0.0
    %151 = vmatprep.subr.mxu0 0.0
    %152 = vmatpush1.xpose.msra.mxu0 0.0
    %153 = vmatprep.subr.mxu0 0.0
    %154 = vmatpush1.xpose.msra.mxu0 0.0
    %155 = vmatprep.subr.mxu0 0.0
    %156 = vmatpush1.xpose.msra.mxu0 0.0
    %157 = vmatprep.subr.mxu0 0.0
    %158 = vmatpush1.xpose.msra.mxu0 0.0
    %159 = vmatprep.subr.mxu0 0.0
    %160 = vmatpush1.xpose.msra.mxu0 0.0
    %161 = vmatprep.subr.mxu0 0.0
    %162 = vmatpush1.xpose.msra.mxu0 0.0
    %163 = vmatprep.subr.mxu0 0.0
    %164 = vmatpush1.xpose.msra.mxu0 0.0
    %165 = vmatprep.subr.mxu0 0.0
    %166 = vmatpush1.xpose.msra.mxu0 0.0
    %167 = vmatprep.subr.mxu0 0.0
    %168 = vmatpush1.xpose.msra.mxu0 0.0
    %169 = vmatprep.subr.mxu0 0.0
    %170 = vmatpush1.xpose.msra.mxu0 0.0
    %171 = vmatprep.subr.mxu0 0.0
    %172 = vmatpush1.xpose.msra.mxu0 0.0
    %173 = vmatprep.subr.mxu0 0.0
    %174 = vmatpush1.xpose.msra.mxu0 0.0
    %175 = vmatprep.subr.mxu0 0.0
    %176 = vmatpush1.xpose.msra.mxu0 0.0
    %177 = vmatprep.subr.mxu0 0.0
    %178 = vmatpush1.xpose.msra.mxu0 0.0
    %179 = vmatprep.subr.mxu0 0.0
    %180 = vmatpush1.xpose.msra.mxu0 0.0
    %181 = vmatprep.mubr.f32.mxu0 0.0
    %182 = vmatmul.mubr.f32.gmra.mrb[0].mxu0 %v67
    %v183 = vpop.f32.mrb[0].mxu0
    %v184 = vadd.f32 %v63, %v183
    %v185 = vpop.f32.mrb[0].mxu0
    %186 = vdwg.mxu0
    %v187 = vmin.f32 %v184, 20.0
    %v188 = vmul.f32 %v187, 1.442695
    %v189 = vpow.pop %v188
    %v190 = vadd.f32 %v189, 1.0
    %v191 = vmul.f32 %v190, %v190
    %v192 = vsub.f32 %v191, 1.0
    %v193 = vadd.f32 %v191, 1.0
    %v194 = vrcp.pop %v193
    %v195 = vmul.f32 %v192, %v194
    %vm196 = vcmp.gt.f32.partialorder %v184, 20.0
    %v197 = vmul.f32 %v184, %v195
    %v198 = vsel %vm196, %v184, %v197
    %v199 = vld [vmem:[%s3] sm:$0xff]
    %v200 = vld [vmem:[%s3 + $0x8] sm:$0xff]
    %v201 = vld [vmem:[%s3 + $0x10] sm:$0xff]
    %v202 = vld [vmem:[%s3 + $0x18] sm:$0xff]
    %v203 = vld [vmem:[%s3 + $0x20] sm:$0xff]
    %v204 = vld [vmem:[%s3 + $0x28] sm:$0xff]
    %v205 = vld [vmem:[%s3 + $0x30] sm:$0xff]
    %v206 = vld [vmem:[%s3 + $0x38] sm:$0xff]
    %v207 = vld [vmem:[%s3 + $0x40] sm:$0xff]
    %v208 = vld [vmem:[%s3 + $0x48] sm:$0xff]
    %v209 = vld [vmem:[%s3 + $0x50] sm:$0xff]
    %v210 = vld [vmem:[%s3 + $0x58] sm:$0xff]
    %v211 = vld [vmem:[%s3 + $0x60] sm:$0xff]
    %v212 = vld [vmem:[%s3 + $0x68] sm:$0xff]
    %v213 = vld [vmem:[%s3 + $0x70] sm:$0xff]
    %v214 = vld [vmem:[%s3 + $0x78] sm:$0xff]
    %v215 = vld [vmem:[%s4] sm:$0x1]
    %v217 = vlaneseq
    %v218 = vshrl.u32 %v217, 7
    %v219 = vsub.s32 0, %v218
    %v220 = vrot.slane %v215, %v219
    %222 = vmatprep.subr.mxu0 0.0
    %223 = vmatpush1.xpose.msra.mxu0 %v199
    %224 = vmatprep.subr.mxu0 0.0
    %225 = vmatpush1.xpose.msra.mxu0 %v200
    %226 = vmatprep.subr.mxu0 0.0
    %227 = vmatpush1.xpose.msra.mxu0 %v201
    %228 = vmatprep.subr.mxu0 0.0
    %229 = vmatpush1.xpose.msra.mxu0 %v202
    %230 = vmatprep.subr.mxu0 0.0
    %231 = vmatpush1.xpose.msra.mxu0 %v203
    %232 = vmatprep.subr.mxu0 0.0
    %233 = vmatpush1.xpose.msra.mxu0 %v204
    %234 = vmatprep.subr.mxu0 0.0
    %235 = vmatpush1.xpose.msra.mxu0 %v205
    %236 = vmatprep.subr.mxu0 0.0
    %237 = vmatpush1.xpose.msra.mxu0 %v206
    %238 = vmatprep.subr.mxu0 0.0
    %239 = vmatpush1.xpose.msra.mxu0 %v207
    %240 = vmatprep.subr.mxu0 0.0
    %241 = vmatpush1.xpose.msra.mxu0 %v208
    %242 = vmatprep.subr.mxu0 0.0
    %243 = vmatpush1.xpose.msra.mxu0 %v209
    %244 = vmatprep.subr.mxu0 0.0
    %245 = vmatpush1.xpose.msra.mxu0 %v210
    %246 = vmatprep.subr.mxu0 0.0
    %247 = vmatpush1.xpose.msra.mxu0 %v211
    %248 = vmatprep.subr.mxu0 0.0
    %249 = vmatpush1.xpose.msra.mxu0 %v212
    %250 = vmatprep.subr.mxu0 0.0
    %251 = vmatpush1.xpose.msra.mxu0 %v213
    %252 = vmatprep.subr.mxu0 0.0
    %253 = vmatpush1.xpose.msra.mxu0 %v214
    %254 = vmatprep.subr.mxu0 0.0
    %255 = vmatpush1.xpose.msra.mxu0 0.0
    %256 = vmatprep.subr.mxu0 0.0
    %257 = vmatpush1.xpose.msra.mxu0 0.0
    %258 = vmatprep.subr.mxu0 0.0
    %259 = vmatpush1.xpose.msra.mxu0 0.0
    %260 = vmatprep.subr.mxu0 0.0
    %261 = vmatpush1.xpose.msra.mxu0 0.0
    %262 = vmatprep.subr.mxu0 0.0
    %263 = vmatpush1.xpose.msra.mxu0 0.0
    %264 = vmatprep.subr.mxu0 0.0
    %265 = vmatpush1.xpose.msra.mxu0 0.0
    %266 = vmatprep.subr.mxu0 0.0
    %267 = vmatpush1.xpose.msra.mxu0 0.0
    %268 = vmatprep.subr.mxu0 0.0
    %269 = vmatpush1.xpose.msra.mxu0 0.0
    %270 = vmatprep.subr.mxu0 0.0
    %271 = vmatpush1.xpose.msra.mxu0 0.0
    %272 = vmatprep.subr.mxu0 0.0
    %273 = vmatpush1.xpose.msra.mxu0 0.0
    %274 = vmatprep.subr.mxu0 0.0
    %275 = vmatpush1.xpose.msra.mxu0 0.0
    %276 = vmatprep.subr.mxu0 0.0
    %277 = vmatpush1.xpose.msra.mxu0 0.0
    %278 = vmatprep.subr.mxu0 0.0
    %279 = vmatpush1.xpose.msra.mxu0 0.0
    %280 = vmatprep.subr.mxu0 0.0
    %281 = vmatpush1.xpose.msra.mxu0 0.0
    %282 = vmatprep.subr.mxu0 0.0
    %283 = vmatpush1.xpose.msra.mxu0 0.0
    %284 = vmatprep.subr.mxu0 0.0
    %285 = vmatpush1.xpose.msra.mxu0 0.0
    %286 = vmatprep.mubr.f32.mxu0 0.0
    %287 = vmatmul.mubr.f32.gmra.mrb[0].mxu0 %v198
    %v288 = vpop.f32.mrb[0].mxu0
    %v289 = vadd.f32 %v220, %v288
    %v290 = vpop.f32.mrb[0].mxu0
    %291 = vdwg.mxu0
    %v292 = vmin.f32 %v289, 20.0
    %v293 = vmul.f32 %v292, 1.442695
    %v294 = vpow.pop %v293
    %v295 = vadd.f32 %v294, 1.0
    %v296 = vmul.f32 %v295, %v295
    %v297 = vsub.f32 %v296, 1.0
    %v298 = vadd.f32 %v296, 1.0
    %v299 = vrcp.pop %v298
    %v300 = vmul.f32 %v297, %v299
    %vm301 = vcmp.gt.f32.partialorder %v289, 20.0
    %v302 = vmul.f32 %v289, %v300
    %v303 = vsel %vm301, %v289, %v302
    %v304 = vld [vmem:[#allocation2] sm:$0xff]
    %v305 = vld [vmem:[#allocation2 + $0x8] sm:$0xff]
    %v306 = vld [vmem:[#allocation2 + $0x10] sm:$0xff]
    %v307 = vld [vmem:[#allocation2 + $0x18] sm:$0xff]
    %v308 = vld [vmem:[#allocation2 + $0x20] sm:$0xff]
    %v309 = vld [vmem:[#allocation2 + $0x28] sm:$0xff]
    %v310 = vld [vmem:[#allocation2 + $0x30] sm:$0xff]
    %v311 = vld [vmem:[#allocation2 + $0x38] sm:$0xff]
    %v312 = vld [vmem:[#allocation2 + $0x40] sm:$0xff]
    %v313 = vld [vmem:[#allocation2 + $0x48] sm:$0xff]
    %v314 = vld [vmem:[#allocation2 + $0x50] sm:$0xff]
    %v315 = vld [vmem:[#allocation2 + $0x58] sm:$0xff]
    %v316 = vld [vmem:[#allocation2 + $0x60] sm:$0xff]
    %v317 = vld [vmem:[#allocation2 + $0x68] sm:$0xff]
    %v318 = vld [vmem:[#allocation2 + $0x70] sm:$0xff]
    %v319 = vld [vmem:[#allocation2 + $0x78] sm:$0xff]
    %v320 = vld [vmem:[%s6] sm:$0x1]
    %v322 = vlaneseq
    %v323 = vshrl.u32 %v322, 7
    %v324 = vsub.s32 0, %v323
    %v325 = vrot.slane %v320, %v324
    %327 = vmatprep.subr.mxu0 0.0
    %328 = vmatpush1.xpose.msra.mxu0 %v304
    %329 = vmatprep.subr.mxu0 0.0
    %330 = vmatpush1.xpose.msra.mxu0 %v305
    %331 = vmatprep.subr.mxu0 0.0
    %332 = vmatpush1.xpose.msra.mxu0 %v306
    %333 = vmatprep.subr.mxu0 0.0
    %334 = vmatpush1.xpose.msra.mxu0 %v307
    %335 = vmatprep.subr.mxu0 0.0
    %336 = vmatpush1.xpose.msra.mxu0 %v308
    %337 = vmatprep.subr.mxu0 0.0
    %338 = vmatpush1.xpose.msra.mxu0 %v309
    %339 = vmatprep.subr.mxu0 0.0
    %340 = vmatpush1.xpose.msra.mxu0 %v310
    %341 = vmatprep.subr.mxu0 0.0
    %342 = vmatpush1.xpose.msra.mxu0 %v311
    %343 = vmatprep.subr.mxu0 0.0
    %344 = vmatpush1.xpose.msra.mxu0 %v312
    %345 = vmatprep.subr.mxu0 0.0
    %346 = vmatpush1.xpose.msra.mxu0 %v313
    %347 = vmatprep.subr.mxu0 0.0
    %348 = vmatpush1.xpose.msra.mxu0 %v314
    %349 = vmatprep.subr.mxu0 0.0
    %350 = vmatpush1.xpose.msra.mxu0 %v315
    %351 = vmatprep.subr.mxu0 0.0
    %352 = vmatpush1.xpose.msra.mxu0 %v316
    %353 = vmatprep.subr.mxu0 0.0
    %354 = vmatpush1.xpose.msra.mxu0 %v317
    %355 = vmatprep.subr.mxu0 0.0
    %356 = vmatpush1.xpose.msra.mxu0 %v318
    %357 = vmatprep.subr.mxu0 0.0
    %358 = vmatpush1.xpose.msra.mxu0 %v319
    %359 = vmatprep.subr.mxu0 0.0
    %360 = vmatpush1.xpose.msra.mxu0 0.0
    %361 = vmatprep.subr.mxu0 0.0
    %362 = vmatpush1.xpose.msra.mxu0 0.0
    %363 = vmatprep.subr.mxu0 0.0
    %364 = vmatpush1.xpose.msra.mxu0 0.0
    %365 = vmatprep.subr.mxu0 0.0
    %366 = vmatpush1.xpose.msra.mxu0 0.0
    %367 = vmatprep.subr.mxu0 0.0
    %368 = vmatpush1.xpose.msra.mxu0 0.0
    %369 = vmatprep.subr.mxu0 0.0
    %370 = vmatpush1.xpose.msra.mxu0 0.0
    %371 = vmatprep.subr.mxu0 0.0
    %372 = vmatpush1.xpose.msra.mxu0 0.0
    %373 = vmatprep.subr.mxu0 0.0
    %374 = vmatpush1.xpose.msra.mxu0 0.0
    %375 = vmatprep.subr.mxu0 0.0
    %376 = vmatpush1.xpose.msra.mxu0 0.0
    %377 = vmatprep.subr.mxu0 0.0
    %378 = vmatpush1.xpose.msra.mxu0 0.0
    %379 = vmatprep.subr.mxu0 0.0
    %380 = vmatpush1.xpose.msra.mxu0 0.0
    %381 = vmatprep.subr.mxu0 0.0
    %382 = vmatpush1.xpose.msra.mxu0 0.0
    %383 = vmatprep.subr.mxu0 0.0
    %384 = vmatpush1.xpose.msra.mxu0 0.0
    %385 = vmatprep.subr.mxu0 0.0
    %386 = vmatpush1.xpose.msra.mxu0 0.0
    %387 = vmatprep.subr.mxu0 0.0
    %388 = vmatpush1.xpose.msra.mxu0 0.0
    %389 = vmatprep.subr.mxu0 0.0
    %390 = vmatpush1.xpose.msra.mxu0 0.0
    %391 = vmatprep.mubr.f32.mxu0 0.0
    %392 = vmatmul.mubr.f32.gmra.mrb[0].mxu0 %v303
    %v393 = vpop.f32.mrb[0].mxu0
    %v394 = vadd.f32 %v325, %v393
    %v395 = vpop.f32.mrb[0].mxu0
    %396 = vdwg.mxu0
    %397 = vst [vmem:[#allocation5] sm:$0xff] %v394
    // Predicated region
    $region34: #{tpu_custom_call.1} parent=1 // pred_check
      _
    $region35: #{tpu_custom_call.1} parent=1 // pred_check_branch
      %399 = sbr.rel (0) target = $region37
    $region36: #{tpu_custom_call.1} parent=1 // pred_region
      %s401 = ssub.s32 128, 128
      %402 = vsyncadd [#allocation4], %s401
      %s404 = sshll.u32 [#allocation5], 4
      %s405 = int_to_ptr.vmem [resolvable:$true] %s404
      %407 = dma.vmem_to_hbm [thread:$0]  %s405, 128, %s7, [#allocation4]
    $region37: #{tpu_custom_call.1} parent=1 // pred_fallthru
      _
    // Predicated region
    $region38: #{tpu_custom_call.1} parent=1 // pred_check
      _
    $region39: #{tpu_custom_call.1} parent=1 // pred_check_branch
      %409 = sbr.rel (0) target = $region41
    $region40: #{tpu_custom_call.1} parent=1 // pred_region
      %410 = dma.done [#allocation4], 128
    $region41: #{tpu_custom_call.1} parent=1 // pred_fallthru
      _
    %411 = vsyncpa [#allocation3], 1
    %412 = vsyncpa [#allocation4], 1

</llo_original>
